<compile_context>
chip_gen: v5e
topology: v5e:2x2
jax: 0.10.0
libtpu: 0.0.40
codegen_flags: <defaults>
</compile_context>

<pallas_src>
import functools

import jax
import jax.numpy as jnp
from jax.experimental import pallas as pl
from jax.experimental.pallas import tpu as pltpu

HIDDEN = 128  # fc1/fc2 width, fixed by the module


def _round_up(n, m):
    return ((n + m - 1) // m) * m


def actor_kernel(x_ref, w1_ref, w2_ref, w3_ref, b1_ref, b2_ref, b3_ref, o_ref):
    """One batch tile: fc1 + ReLU -> fc2 + ReLU -> fc3 + tanh."""
    cd = w1_ref.dtype                 # compute dtype for the MXU operands
    n_action = o_ref.shape[-1]

    # fc1 + ReLU.  x arrives as unpadded f32; cast to compute dtype in-core.
    h1 = jnp.dot(x_ref[...].astype(cd), w1_ref[...],
                 preferred_element_type=jnp.float32)
    h1 = jnp.maximum(h1 + b1_ref[...], 0.0)

    # fc2 + ReLU
    h2 = jnp.dot(h1.astype(cd), w2_ref[...],
                 preferred_element_type=jnp.float32)
    h2 = jnp.maximum(h2 + b2_ref[...], 0.0)

    # fc3 + tanh.  w3 is zero-padded once (in prepare_params) to a 128-wide
    # lane-aligned slab for conservative MXU shapes; only the first n_action
    # columns are bias-added, tanh'd and stored, so the HBM writeback is
    # n_action lanes wide.
    h3 = jnp.dot(h2.astype(cd), w3_ref[...],
                 preferred_element_type=jnp.float32)
    h3 = h3[:, :n_action] + b3_ref[...]
    o_ref[...] = jnp.tanh(h3).astype(o_ref.dtype)


def prepare_params(params, compute_dtype=jnp.bfloat16):
    """One-time parameter prep, hoisted out of the per-call forward path.

    Casts the matmul operands to `compute_dtype`, keeps biases in f32 row
    vectors, and zero-pads w3 to a lane-aligned (128, round_up(n_action,128))
    slab.  Call once; reuse the returned dict for every forward call.
    """
    n_action = params["w3"].shape[1]
    npad = _round_up(n_action, 128) - n_action
    return {
        "w1": params["w1"].astype(compute_dtype),
        "w2": params["w2"].astype(compute_dtype),
        "w3": jnp.pad(params["w3"], ((0, 0), (0, npad))).astype(compute_dtype),
        "b1": params["b1"].reshape(1, -1).astype(jnp.float32),
        "b2": params["b2"].reshape(1, -1).astype(jnp.float32),
        "b3": params["b3"].reshape(1, -1).astype(jnp.float32),
    }


@functools.partial(jax.jit, static_argnames=("tb",))
def actor_forward(x, prepared, *, tb=1024):
    """x: [B, n_state] float32.  prepared: output of prepare_params().

    Returns [B, n_action] float32.
    """
    w1, w2, w3 = prepared["w1"], prepared["w2"], prepared["w3"]
    b1, b2, b3 = prepared["b1"], prepared["b2"], prepared["b3"]

    B, n_state = x.shape
    hidden = w1.shape[1]
    np_pad = w3.shape[1]          # lane-padded fc3 width (multiple of 128)
    n_action = b3.shape[1]

    # Batch tile: multiple of 8 sublanes, large (mem-bound kernel), but capped
    # so the grid has >= 2 steps whenever B allows -> both v7x TensorCores get
    # work via the "parallel" batch axis.
    TB = min(tb, _round_up(pl.cdiv(B, 2), 8))
    grid = (pl.cdiv(B, TB),)      # ragged last tile is masked by Pallas

    return pl.pallas_call(
        actor_kernel,
        out_shape=jax.ShapeDtypeStruct((B, n_action), jnp.float32),
        grid=grid,
        in_specs=[
            pl.BlockSpec((TB, n_state), lambda i: (i, 0)),      # x: batch-tiled
            pl.BlockSpec((n_state, hidden), lambda i: (0, 0)),  # w1: resident
            pl.BlockSpec((hidden, hidden), lambda i: (0, 0)),   # w2: resident
            pl.BlockSpec((hidden, np_pad), lambda i: (0, 0)),   # w3: resident
            pl.BlockSpec((1, hidden), lambda i: (0, 0)),        # b1: resident
            pl.BlockSpec((1, hidden), lambda i: (0, 0)),        # b2: resident
            pl.BlockSpec((1, n_action), lambda i: (0, 0)),      # b3: resident
        ],
        out_specs=pl.BlockSpec((TB, n_action), lambda i: (i, 0)),
        compiler_params=pltpu.CompilerParams(
            dimension_semantics=("parallel",),
        ),
    )(x, w1, w2, w3, b1, b2, b3)


def init_actor_params(key, n_state, n_action, init_w=0.003):
    """Deterministic init matching PyTorch Linear defaults + the fc3 override.

    PyTorch nn.Linear default: U(-1/sqrt(fan_in), 1/sqrt(fan_in)) for W and b.
    fc3 is overridden to U(-init_w, init_w).
    Weights stored as [in_features, out_features].
    """
    k1, k2, k3, k4, k5, k6 = jax.random.split(key, 6)

    def uni(k, shape, bound):
        return jax.random.uniform(k, shape, jnp.float32, -bound, bound)

    b_fc1 = 1.0 / jnp.sqrt(jnp.float32(n_state))
    b_fc2 = 1.0 / jnp.sqrt(jnp.float32(HIDDEN))
    return {
        "w1": uni(k1, (n_state, HIDDEN), b_fc1),
        "b1": uni(k2, (1, HIDDEN), b_fc1),
        "w2": uni(k3, (HIDDEN, HIDDEN), b_fc2),
        "b2": uni(k4, (1, HIDDEN), b_fc2),
        "w3": uni(k5, (HIDDEN, n_action), init_w),
        "b3": uni(k6, (1, n_action), init_w),
    }


def actor_reference(x, params):
    """Pure-JAX f32 reference for correctness check."""
    h1 = jnp.maximum(x @ params["w1"] + params["b1"], 0.0)
    h2 = jnp.maximum(h1 @ params["w2"] + params["b2"], 0.0)
    return jnp.tanh(h2 @ params["w3"] + params["b3"])


if __name__ == "__main__":
    key = jax.random.PRNGKey(0)
    n_state, n_action = 32, 8

    kp, kx1, kx2 = jax.random.split(key, 3)
    params = init_actor_params(kp, n_state, n_action)

    # Primary check: batch=16 -> TB=8, grid of 2 steps (exercises pipelining
    # and the two-TensorCore sharding path on v7x).
    batch = 16
    x = jax.random.normal(kx1, (batch, n_state), dtype=jnp.float32)
    ref = actor_reference(x, params)

    # f32 compute path: should match the reference tightly.
    prep_f32 = prepare_params(params, compute_dtype=jnp.float32)
    out_f32 = jax.block_until_ready(actor_forward(x, prep_f32))
    assert out_f32.shape == (batch, n_action)
    assert jnp.allclose(out_f32, ref, atol=1e-5, rtol=1e-5), "f32 mismatch"

    # bf16 matmul-operand path (default fast path on v6e+/v7x).
    prep_bf16 = prepare_params(params)
    out_bf16 = jax.block_until_ready(actor_forward(x, prep_bf16))
    assert out_bf16.shape == (batch, n_action)
    assert jnp.allclose(out_bf16, ref, atol=2e-2, rtol=2e-2), "bf16 mismatch"

    # Ragged batch (B not a multiple of the tile): masked boundary tile.
    x2 = jax.random.normal(kx2, (13, n_state), dtype=jnp.float32)
    out2 = jax.block_until_ready(actor_forward(x2, prep_bf16))
    assert out2.shape == (13, n_action)
    assert jnp.allclose(out2, actor_reference(x2, params),
                        atol=2e-2, rtol=2e-2), "ragged-batch mismatch"

    print("KERNEL_OK")
</pallas_src>

<mosaic_0001>
module attributes {stable_mosaic.version = 11 : i64} {
  func.func @actor_kernel(%arg0: i32, %arg1: memref<8x32xf32, #tpu.memory_space<vmem>>, %arg2: memref<32x128xf32, #tpu.memory_space<vmem>>, %arg3: memref<128x128xf32, #tpu.memory_space<vmem>>, %arg4: memref<128x128xf32, #tpu.memory_space<vmem>>, %arg5: memref<1x128xf32, #tpu.memory_space<vmem>>, %arg6: memref<1x128xf32, #tpu.memory_space<vmem>>, %arg7: memref<1x8xf32, #tpu.memory_space<vmem>>, %arg8: memref<8x8xf32, #tpu.memory_space<vmem>>) attributes {dimension_semantics = [#tpu.dimension_semantics<parallel>], iteration_bounds = array<i64: 2>, scalar_prefetch = 0 : i64, scratch_operands = 0 : i64, tpu.core_type = #tpu.core_type<tc>, window_params = [{transform_indices = @transform_0, window_bounds = array<i64: 8, 32>}, {pipeline_mode = #tpu.pipeline_mode<synchronous>, transform_indices = @transform_1, window_bounds = array<i64: 32, 128>}, {pipeline_mode = #tpu.pipeline_mode<synchronous>, transform_indices = @transform_2, window_bounds = array<i64: 128, 128>}, {pipeline_mode = #tpu.pipeline_mode<synchronous>, transform_indices = @transform_3, window_bounds = array<i64: 128, 128>}, {pipeline_mode = #tpu.pipeline_mode<synchronous>, transform_indices = @transform_4, window_bounds = array<i64: 1, 128>}, {pipeline_mode = #tpu.pipeline_mode<synchronous>, transform_indices = @transform_5, window_bounds = array<i64: 1, 128>}, {pipeline_mode = #tpu.pipeline_mode<synchronous>, transform_indices = @transform_6, window_bounds = array<i64: 1, 8>}, {transform_indices = @transform_7, window_bounds = array<i64: 8, 8>}]} {
    %c0 = arith.constant 0 : index
    %c0_0 = arith.constant 0 : index
    %0 = vector.load %arg1[%c0, %c0_0] : memref<8x32xf32, #tpu.memory_space<vmem>>, vector<8x32xf32>
    %c0_1 = arith.constant 0 : index
    %c0_2 = arith.constant 0 : index
    %1 = vector.load %arg2[%c0_1, %c0_2] : memref<32x128xf32, #tpu.memory_space<vmem>>, vector<32x128xf32>
    %cst = arith.constant dense<0.000000e+00> : vector<8x128xf32>
    %2 = tpu.matmul %0, %1, %cst {dimension_numbers = #tpu.dot_dimension_numbers<[1], [0], [0], [1], [0, 0, 1, 1], [], []>} : vector<8x32xf32>, vector<32x128xf32>, vector<8x128xf32> -> vector<8x128xf32>
    %c0_3 = arith.constant 0 : index
    %c0_4 = arith.constant 0 : index
    %3 = vector.load %arg5[%c0_3, %c0_4] : memref<1x128xf32, #tpu.memory_space<vmem>>, vector<1x128xf32>
    %4 = vector.broadcast %3 : vector<1x128xf32> to vector<8x128xf32>
    %5 = arith.addf %2, %4 : vector<8x128xf32>
    %cst_5 = arith.constant 0.000000e+00 : f32
    %6 = vector.broadcast %cst_5 : f32 to vector<8x128xf32>
    %7 = arith.maximumf %5, %6 : vector<8x128xf32>
    %c0_6 = arith.constant 0 : index
    %c0_7 = arith.constant 0 : index
    %8 = vector.load %arg3[%c0_6, %c0_7] : memref<128x128xf32, #tpu.memory_space<vmem>>, vector<128x128xf32>
    %cst_8 = arith.constant dense<0.000000e+00> : vector<8x128xf32>
    %9 = tpu.matmul %7, %8, %cst_8 {dimension_numbers = #tpu.dot_dimension_numbers<[1], [0], [0], [1], [0, 0, 1, 1], [], []>} : vector<8x128xf32>, vector<128x128xf32>, vector<8x128xf32> -> vector<8x128xf32>
    %c0_9 = arith.constant 0 : index
    %c0_10 = arith.constant 0 : index
    %10 = vector.load %arg6[%c0_9, %c0_10] : memref<1x128xf32, #tpu.memory_space<vmem>>, vector<1x128xf32>
    %11 = vector.broadcast %10 : vector<1x128xf32> to vector<8x128xf32>
    %12 = arith.addf %9, %11 : vector<8x128xf32>
    %cst_11 = arith.constant 0.000000e+00 : f32
    %13 = vector.broadcast %cst_11 : f32 to vector<8x128xf32>
    %14 = arith.maximumf %12, %13 : vector<8x128xf32>
    %c0_12 = arith.constant 0 : index
    %c0_13 = arith.constant 0 : index
    %15 = vector.load %arg4[%c0_12, %c0_13] : memref<128x128xf32, #tpu.memory_space<vmem>>, vector<128x128xf32>
    %cst_14 = arith.constant dense<0.000000e+00> : vector<8x128xf32>
    %16 = tpu.matmul %14, %15, %cst_14 {dimension_numbers = #tpu.dot_dimension_numbers<[1], [0], [0], [1], [0, 0, 1, 1], [], []>} : vector<8x128xf32>, vector<128x128xf32>, vector<8x128xf32> -> vector<8x128xf32>
    %17 = vector.extract_strided_slice %16 {offsets = [0, 0], sizes = [8, 8], strides = [1, 1]} : vector<8x128xf32> to vector<8x8xf32>
    %c0_15 = arith.constant 0 : index
    %c0_16 = arith.constant 0 : index
    %18 = vector.load %arg7[%c0_15, %c0_16] : memref<1x8xf32, #tpu.memory_space<vmem>>, vector<1x8xf32>
    %19 = vector.broadcast %18 : vector<1x8xf32> to vector<8x8xf32>
    %20 = arith.addf %17, %19 : vector<8x8xf32>
    %21 = math.tanh %20 : vector<8x8xf32>
    %c0_17 = arith.constant 0 : index
    %c0_18 = arith.constant 0 : index
    %22 = vector.load %arg8[%c0_17, %c0_18] : memref<8x8xf32, #tpu.memory_space<vmem>>, vector<8x8xf32>
    tpu.vector_store %arg8[%c0_17, %c0_18], %21 {strides = array<i32>} : memref<8x8xf32, #tpu.memory_space<vmem>>, vector<8x8xf32>,
    return
  }
  func.func @transform_0(%arg0: i32) -> (i32, i32) {
    %c0_i32 = arith.constant 0 : i32
    %c0_i32_0 = arith.constant 0 : i32
    return %arg0, %c0_i32 : i32, i32
  }
  func.func @transform_1(%arg0: i32) -> (i32, i32) {
    %c0_i32 = arith.constant 0 : i32
    %c0_i32_0 = arith.constant 0 : i32
    %c0_i32_1 = arith.constant 0 : i32
    return %c0_i32, %c0_i32_0 : i32, i32
  }
  func.func @transform_2(%arg0: i32) -> (i32, i32) {
    %c0_i32 = arith.constant 0 : i32
    %c0_i32_0 = arith.constant 0 : i32
    %c0_i32_1 = arith.constant 0 : i32
    return %c0_i32, %c0_i32_0 : i32, i32
  }
  func.func @transform_3(%arg0: i32) -> (i32, i32) {
    %c0_i32 = arith.constant 0 : i32
    %c0_i32_0 = arith.constant 0 : i32
    %c0_i32_1 = arith.constant 0 : i32
    return %c0_i32, %c0_i32_0 : i32, i32
  }
  func.func @transform_4(%arg0: i32) -> (i32, i32) {
    %c0_i32 = arith.constant 0 : i32
    %c0_i32_0 = arith.constant 0 : i32
    %c0_i32_1 = arith.constant 0 : i32
    return %c0_i32, %c0_i32_0 : i32, i32
  }
  func.func @transform_5(%arg0: i32) -> (i32, i32) {
    %c0_i32 = arith.constant 0 : i32
    %c0_i32_0 = arith.constant 0 : i32
    %c0_i32_1 = arith.constant 0 : i32
    return %c0_i32, %c0_i32_0 : i32, i32
  }
  func.func @transform_6(%arg0: i32) -> (i32, i32) {
    %c0_i32 = arith.constant 0 : i32
    %c0_i32_0 = arith.constant 0 : i32
    %c0_i32_1 = arith.constant 0 : i32
    return %c0_i32, %c0_i32_0 : i32, i32
  }
  func.func @transform_7(%arg0: i32) -> (i32, i32) {
    %c0_i32 = arith.constant 0 : i32
    %c0_i32_0 = arith.constant 0 : i32
    return %arg0, %c0_i32 : i32, i32
  }
}

</mosaic_0001>

<llo_original>
// kernel: actor_forward.1
$region0: #{actor_forward.1}
  #allocation0 [shape = 'u32[]', space=smem, size = 0x4, offset = 0x4, fixed_abs, tag = 'smem constant byte address 0x4 - core index']
  #allocation1 [shape = 'u32[72,128]{1,0:T(1,128)}', space=vmem, size = 0x9000, scoped, tag = 'internal scratch']
  %s0 = inlined_call_operand.hbm [shape: f32[16,32], index: 0, kind: input, shape index: {}]
  %s1 = inlined_call_operand.hbm [shape: f32[32,128], index: 1, kind: input, shape index: {}]
  %s2 = inlined_call_operand.hbm [shape: f32[128,128], index: 2, kind: input, shape index: {}]
  %s3 = inlined_call_operand.hbm [shape: f32[128,128], index: 3, kind: input, shape index: {}]
  %s4 = inlined_call_operand.hbm [shape: f32[1,128], index: 4, kind: input, shape index: {}]
  %s5 = inlined_call_operand.vmem [shape: f32[1,128], index: 5, kind: input, shape index: {}]
  %s6 = inlined_call_operand.vmem [shape: f32[1,8], index: 6, kind: input, shape index: {}]
  %s7 = inlined_call_operand.vmem [shape: f32[16,8], index: 7, kind: output, shape index: {}]
  %s8 = sld [smem:[#allocation0]]
  $region81: #{actor_forward.1} parent=0
    _
  %s10 = ssub.s32 1, %s8
  %s11 = scalar_select 0, %s10, %s8
  $region1: #{actor_forward.1} parent=0
    #allocation2 [shape = 'u8[8192]{0}', space=vmem, size = 0x2000, scoped, tag = 'input window, operand 0']
    #allocation3 [shape = 's32[2]{0}', space=sflag, size = 0x8, scoped, tag = 'scoped memory for actor_forward.1']
    #allocation4 [shape = 'u8[16384]{0}', space=vmem, size = 0x4000, scoped, tag = 'input window, operand 1, single buffered']
    #allocation5 [shape = 's32[1]{0}', space=sflag, size = 0x4, scoped, tag = 'scoped memory for actor_forward.1']
    #allocation6 [shape = 'u8[65536]{0}', space=vmem, size = 0x10000, scoped, tag = 'input window, operand 2, single buffered']
    #allocation7 [shape = 'u8[65536]{0}', space=vmem, size = 0x10000, scoped, tag = 'input window, operand 3, single buffered']
    #allocation8 [shape = 's32[1]{0}', space=sflag, size = 0x4, scoped, tag = 'scoped memory for actor_forward.1']
    #allocation9 [shape = 'u8[512]{0}', space=vmem, size = 0x400, scoped, tag = 'input window, operand 4, single buffered']
    %12 = vsyncpa [#allocation3], 0
    %s13 = scalar_lea.sflag [#allocation3], 1
    %14 = vsyncpa %s13, 0
    %15 = vsyncpa [#allocation5], 0
    %16 = vsyncpa [#allocation8], 0
    loop: start=0, step=1, limit=4
    $region2: #{actor_forward.1} parent=1 // loop_pre_header
      _
    $region3: #{actor_forward.1} parent=1 // loop_header
      %s18 = sphi 0, %s22
      %p19 = scmp.ge.s32.totalorder %s18, 4
      %s28 = sphi 0, %s30
      %s31 = sphi 0, %s28
      %s32 = sphi 0, %s31
      %s48 = sphi 0, %s32
      %s52 = sphi 0, %s52
      %s54 = sphi 0, %s52
      %s55 = sphi 0, %s54
      %s69 = sphi 0, %s55
      %s73 = sphi 0, %s73
      %s75 = sphi 0, %s73
      %s76 = sphi 0, %s75
      %s90 = sphi 0, %s76
      %s94 = sphi 0, %s94
      %s96 = sphi 0, %s94
      %s97 = sphi 0, %s96
      %s111 = sphi 0, %s97
      %s115 = sphi 0, %s115
      %s117 = sphi 0, %s115
      %s118 = sphi 0, %s117
      %s132 = sphi 0, %s118
      %s136 = sphi 0, %s136
      %s138 = sphi 0, %s136
      %s139 = sphi 0, %s138
      %s153 = sphi 0, %s139
      %s157 = sphi 0, %s157
      %s159 = sphi 0, %s157
      %s160 = sphi 0, %s159
      %s174 = sphi 0, %s160
      %s180 = sphi 0, %s182
      %s183 = sphi 0, %s180
      %s184 = sphi 0, %s183
      %s200 = sphi 0, %s184
    $region4: #{actor_forward.1} parent=1 // loop_header_branch
      %21 = sbr.rel (%p19) target = $region8
    $region5: #{actor_forward.1} parent=1 // loop_body
      %s23 = ssub.s32 %s18, 1
      %s24 = ssub.s32 %s18, 2
      %s25 = sadd.s32 %s18, 1
      %s26 = ssub.s32 %s18, %s25
      %p27 = scmp.eq.s32.totalorder %s26, 0
      %s29 = sadd.s32 %s28, 1
      %s30 = scalar_select %p27, %s28, %s29
      %p33 = pneg %p27
      %p34 = scmp.eq.s32.totalorder %s18, 1
      %p35 = por %p33, %p34
      %p36 = scmp.ne.s32.totalorder %s28, %s31
      %p37 = scmp.eq.s32.totalorder %s18, 0
      %p38 = por %p36, %p37
      %p39 = scmp.ne.s32.totalorder %s28, %s31
      %p40 = scmp.eq.s32.totalorder %s23, 1
      %p41 = por %p39, %p40
      %p42 = scmp.ne.s32.totalorder %s31, %s32
      %p43 = scmp.eq.s32.totalorder %s23, 0
      %p44 = por %p42, %p43
      %p45 = scmp.ne.s32.totalorder %s31, %s32
      %p46 = scmp.eq.s32.totalorder %s24, 1
      %p47 = por %p45, %p46
      %p49 = scmp.ne.s32.totalorder %s32, %s48
      %p50 = scmp.eq.s32.totalorder %s24, 0
      %p51 = por %p49, %p50
      %s53 = sadd.s32 %s52, 1
      %p56 = scmp.eq.s32.totalorder %s18, 1
      %p57 = scmp.ne.s32.totalorder %s52, %s54
      %p58 = scmp.eq.s32.totalorder %s18, 0
      %p59 = por %p57, %p58
      %p60 = scmp.ne.s32.totalorder %s52, %s54
      %p61 = scmp.eq.s32.totalorder %s23, 1
      %p62 = por %p60, %p61
      %p63 = scmp.ne.s32.totalorder %s54, %s55
      %p64 = scmp.eq.s32.totalorder %s23, 0
      %p65 = por %p63, %p64
      %p66 = scmp.ne.s32.totalorder %s54, %s55
      %p67 = scmp.eq.s32.totalorder %s24, 1
      %p68 = por %p66, %p67
      %p70 = scmp.ne.s32.totalorder %s55, %s69
      %p71 = scmp.eq.s32.totalorder %s24, 0
      %p72 = por %p70, %p71
      %s74 = sadd.s32 %s73, 1
      %p77 = scmp.eq.s32.totalorder %s18, 1
      %p78 = scmp.ne.s32.totalorder %s73, %s75
      %p79 = scmp.eq.s32.totalorder %s18, 0
      %p80 = por %p78, %p79
      %p81 = scmp.ne.s32.totalorder %s73, %s75
      %p82 = scmp.eq.s32.totalorder %s23, 1
      %p83 = por %p81, %p82
      %p84 = scmp.ne.s32.totalorder %s75, %s76
      %p85 = scmp.eq.s32.totalorder %s23, 0
      %p86 = por %p84, %p85
      %p87 = scmp.ne.s32.totalorder %s75, %s76
      %p88 = scmp.eq.s32.totalorder %s24, 1
      %p89 = por %p87, %p88
      %p91 = scmp.ne.s32.totalorder %s76, %s90
      %p92 = scmp.eq.s32.totalorder %s24, 0
      %p93 = por %p91, %p92
      %s95 = sadd.s32 %s94, 1
      %p98 = scmp.eq.s32.totalorder %s18, 1
      %p99 = scmp.ne.s32.totalorder %s94, %s96
      %p100 = scmp.eq.s32.totalorder %s18, 0
      %p101 = por %p99, %p100
      %p102 = scmp.ne.s32.totalorder %s94, %s96
      %p103 = scmp.eq.s32.totalorder %s23, 1
      %p104 = por %p102, %p103
      %p105 = scmp.ne.s32.totalorder %s96, %s97
      %p106 = scmp.eq.s32.totalorder %s23, 0
      %p107 = por %p105, %p106
      %p108 = scmp.ne.s32.totalorder %s96, %s97
      %p109 = scmp.eq.s32.totalorder %s24, 1
      %p110 = por %p108, %p109
      %p112 = scmp.ne.s32.totalorder %s97, %s111
      %p113 = scmp.eq.s32.totalorder %s24, 0
      %p114 = por %p112, %p113
      %s116 = sadd.s32 %s115, 1
      %p119 = scmp.eq.s32.totalorder %s18, 1
      %p120 = scmp.ne.s32.totalorder %s115, %s117
      %p121 = scmp.eq.s32.totalorder %s18, 0
      %p122 = por %p120, %p121
      %p123 = scmp.ne.s32.totalorder %s115, %s117
      %p124 = scmp.eq.s32.totalorder %s23, 1
      %p125 = por %p123, %p124
      %p126 = scmp.ne.s32.totalorder %s117, %s118
      %p127 = scmp.eq.s32.totalorder %s23, 0
      %p128 = por %p126, %p127
      %p129 = scmp.ne.s32.totalorder %s117, %s118
      %p130 = scmp.eq.s32.totalorder %s24, 1
      %p131 = por %p129, %p130
      %p133 = scmp.ne.s32.totalorder %s118, %s132
      %p134 = scmp.eq.s32.totalorder %s24, 0
      %p135 = por %p133, %p134
      %s137 = sadd.s32 %s136, 1
      %p140 = scmp.eq.s32.totalorder %s18, 1
      %p141 = scmp.ne.s32.totalorder %s136, %s138
      %p142 = scmp.eq.s32.totalorder %s18, 0
      %p143 = por %p141, %p142
      %p144 = scmp.ne.s32.totalorder %s136, %s138
      %p145 = scmp.eq.s32.totalorder %s23, 1
      %p146 = por %p144, %p145
      %p147 = scmp.ne.s32.totalorder %s138, %s139
      %p148 = scmp.eq.s32.totalorder %s23, 0
      %p149 = por %p147, %p148
      %p150 = scmp.ne.s32.totalorder %s138, %s139
      %p151 = scmp.eq.s32.totalorder %s24, 1
      %p152 = por %p150, %p151
      %p154 = scmp.ne.s32.totalorder %s139, %s153
      %p155 = scmp.eq.s32.totalorder %s24, 0
      %p156 = por %p154, %p155
      %s158 = sadd.s32 %s157, 1
      %p161 = scmp.eq.s32.totalorder %s18, 1
      %p162 = scmp.ne.s32.totalorder %s157, %s159
      %p163 = scmp.eq.s32.totalorder %s18, 0
      %p164 = por %p162, %p163
      %p165 = scmp.ne.s32.totalorder %s157, %s159
      %p166 = scmp.eq.s32.totalorder %s23, 1
      %p167 = por %p165, %p166
      %p168 = scmp.ne.s32.totalorder %s159, %s160
      %p169 = scmp.eq.s32.totalorder %s23, 0
      %p170 = por %p168, %p169
      %p171 = scmp.ne.s32.totalorder %s159, %s160
      %p172 = scmp.eq.s32.totalorder %s24, 1
      %p173 = por %p171, %p172
      %p175 = scmp.ne.s32.totalorder %s160, %s174
      %p176 = scmp.eq.s32.totalorder %s24, 0
      %p177 = por %p175, %p176
      %s178 = ssub.s32 %s18, %s25
      %p179 = scmp.eq.s32.totalorder %s178, 0
      %s181 = sadd.s32 %s180, 1
      %s182 = scalar_select %p179, %s180, %s181
      %p185 = pneg %p179
      %p186 = scmp.eq.s32.totalorder %s18, 1
      %p187 = por %p185, %p186
      %p188 = scmp.ne.s32.totalorder %s180, %s183
      %p189 = scmp.eq.s32.totalorder %s18, 0
      %p190 = por %p188, %p189
      %p191 = scmp.ne.s32.totalorder %s180, %s183
      %p192 = scmp.eq.s32.totalorder %s23, 1
      %p193 = por %p191, %p192
      %p194 = scmp.ne.s32.totalorder %s183, %s184
      %p195 = scmp.eq.s32.totalorder %s23, 0
      %p196 = por %p194, %p195
      %p197 = scmp.ne.s32.totalorder %s183, %s184
      %p198 = scmp.eq.s32.totalorder %s24, 1
      %p199 = por %p197, %p198
      %p201 = scmp.ne.s32.totalorder %s184, %s200
      %p202 = scmp.eq.s32.totalorder %s24, 0
      %p203 = por %p201, %p202
      %p204 = scmp.le.s32.totalorder 1, %s18
      %p205 = scmp.lt.s32.totalorder %s18, 3
      %p206 = pnand %p204, %p205
      %p207 = pneg %p206
      // Predicated region
      $region9: #{actor_forward.1} parent=5 // pred_check
        _
      $region10: #{actor_forward.1} parent=5 // pred_check_branch
        %209 = sbr.rel (%p206) target = $region12
      $region11: #{actor_forward.1} parent=5 // pred_region
        %s210 = ssub.s32 %s18, 1
        // Predicated region
        $region13: #{actor_forward.1} parent=11 // pred_check
          %p211 = pneg %p65
        $region14: #{actor_forward.1} parent=11 // pred_check_branch
          %213 = sbr.rel (%p211) target = $region16
        $region15: #{actor_forward.1} parent=11 // pred_region
          %215 = vsyncadd [#allocation5], 0
          %s216 = sshll.u32 %s1, 4
          %s217 = int_to_ptr.hbm [resolvable:$true] %s216
          %s218 = sshll.u32 [#allocation4], 4
          %s219 = int_to_ptr.vmem [resolvable:$true] %s218
          %224 = dma.hbm_to_vmem [thread:$0]  %s217, 512, %s219, [#allocation5], 128, 128, 8
        $region16: #{actor_forward.1} parent=11 // pred_fallthru
          _
        // Predicated region
        $region17: #{actor_forward.1} parent=11 // pred_check
          %p225 = pneg %p86
        $region18: #{actor_forward.1} parent=11 // pred_check_branch
          %227 = sbr.rel (%p225) target = $region20
        $region19: #{actor_forward.1} parent=11 // pred_region
          %229 = vsyncadd [#allocation5], 0
          %s230 = sshll.u32 %s2, 4
          %s231 = int_to_ptr.hbm [resolvable:$true] %s230
          %s232 = sshll.u32 [#allocation6], 4
          %s233 = int_to_ptr.vmem [resolvable:$true] %s232
          %238 = dma.hbm_to_vmem [thread:$0]  %s231, 2048, %s233, [#allocation5], 128, 128, 8
        $region20: #{actor_forward.1} parent=11 // pred_fallthru
          _
        // Predicated region
        $region21: #{actor_forward.1} parent=11 // pred_check
          %p239 = pneg %p107
        $region22: #{actor_forward.1} parent=11 // pred_check_branch
          %241 = sbr.rel (%p239) target = $region24
        $region23: #{actor_forward.1} parent=11 // pred_region
          %243 = vsyncadd [#allocation8], 0
          %s244 = sshll.u32 %s3, 4
          %s245 = int_to_ptr.hbm [resolvable:$true] %s244
          %s246 = sshll.u32 [#allocation7], 4
          %s247 = int_to_ptr.vmem [resolvable:$true] %s246
          %252 = dma.hbm_to_vmem [thread:$0]  %s245, 2048, %s247, [#allocation8], 128, 128, 8
        $region24: #{actor_forward.1} parent=11 // pred_fallthru
          _
        // Predicated region
        $region25: #{actor_forward.1} parent=11 // pred_check
          %p253 = pneg %p128
        $region26: #{actor_forward.1} parent=11 // pred_check_branch
          %255 = sbr.rel (%p253) target = $region28
        $region27: #{actor_forward.1} parent=11 // pred_region
          %257 = vsyncadd [#allocation8], 0
          %s259 = sshll.u32 %s4, 4
          %s260 = int_to_ptr.hbm [resolvable:$true] %s259
          %s261 = sshll.u32 [#allocation9], 4
          %s262 = int_to_ptr.vmem [resolvable:$true] %s261
          %264 = dma.hbm_to_vmem [thread:$0]  %s260, 16, %s262, [#allocation8]
        $region28: #{actor_forward.1} parent=11 // pred_fallthru
          _
        // Predicated region
        $region29: #{actor_forward.1} parent=11 // pred_check
          %p265 = pneg %p149
        $region30: #{actor_forward.1} parent=11 // pred_check_branch
          %267 = sbr.rel (%p265) target = $region32
        $region31: #{actor_forward.1} parent=11 // pred_region
          _
        $region32: #{actor_forward.1} parent=11 // pred_fallthru
          _
        // Predicated region
        $region33: #{actor_forward.1} parent=11 // pred_check
          %p268 = pneg %p170
        $region34: #{actor_forward.1} parent=11 // pred_check_branch
          %270 = sbr.rel (%p268) target = $region36
        $region35: #{actor_forward.1} parent=11 // pred_region
          _
        $region36: #{actor_forward.1} parent=11 // pred_fallthru
          _
      $region12: #{actor_forward.1} parent=5 // pred_fallthru
        _
      %p271 = scmp.lt.s32.totalorder %s18, 2
      // Predicated region
      $region37: #{actor_forward.1} parent=5 // pred_check
        %p272 = pneg %p271
      $region38: #{actor_forward.1} parent=5 // pred_check_branch
        %274 = sbr.rel (%p272) target = $region40
      $region39: #{actor_forward.1} parent=5 // pred_region
        // Predicated region
        $region41: #{actor_forward.1} parent=39 // pred_check
          %p275 = pneg %p38
        $region42: #{actor_forward.1} parent=39 // pred_check_branch
          %277 = sbr.rel (%p275) target = $region44
        $region43: #{actor_forward.1} parent=39 // pred_region
          %s278 = sand.u32 %s28, 1
          %s279 = scalar_lea.sflag [#allocation3], %s278
          %s280 = sand.u32 %s28, 1
          %s281 = smul.addr %s280, 8
          %s282 = scalar_lea.vmem [#allocation2], %s281
          %284 = vsyncadd %s279, 0
          %s285 = smul.addr %s18, 8
          %s286 = scalar_lea.hbm %s0, %s285
          %s288 = sshll.u32 %s286, 4
          %s289 = int_to_ptr.hbm [resolvable:$true] %s288
          %s290 = sshll.u32 %s282, 4
          %s291 = int_to_ptr.vmem [resolvable:$true] %s290
          %293 = dma.hbm_to_vmem [thread:$0]  %s289, 128, %s291, %s279
        $region44: #{actor_forward.1} parent=39 // pred_fallthru
          _
      $region40: #{actor_forward.1} parent=5 // pred_fallthru
        _
      %p294 = scmp.le.s32.totalorder 1, %s18
      %p295 = scmp.lt.s32.totalorder %s18, 3
      %p296 = pnand %p294, %p295
      %p297 = pneg %p296
      // Predicated region
      $region45: #{actor_forward.1} parent=5 // pred_check
        _
      $region46: #{actor_forward.1} parent=5 // pred_check_branch
        %299 = sbr.rel (%p296) target = $region48
      $region47: #{actor_forward.1} parent=5 // pred_region
        %s300 = ssub.s32 %s18, 1
        %s301 = sand.u32 %s31, 1
        %s302 = scalar_lea.sflag [#allocation3], %s301
        %s303 = sand.u32 %s31, 1
        %s304 = smul.addr %s303, 8
        %s305 = scalar_lea.vmem [#allocation2], %s304
        // Predicated region
        $region49: #{actor_forward.1} parent=47 // pred_check
          %p306 = pneg %p44
        $region50: #{actor_forward.1} parent=47 // pred_check_branch
          %308 = sbr.rel (%p306) target = $region52
        $region51: #{actor_forward.1} parent=47 // pred_region
          %310 = dma.done %s302, 128
        $region52: #{actor_forward.1} parent=47 // pred_fallthru
          _
        // Predicated region
        $region53: #{actor_forward.1} parent=47 // pred_check
          %p311 = pneg %p65
        $region54: #{actor_forward.1} parent=47 // pred_check_branch
          %313 = sbr.rel (%p311) target = $region56
        $region55: #{actor_forward.1} parent=47 // pred_region
          %315 = dma.done [#allocation5], 512
        $region56: #{actor_forward.1} parent=47 // pred_fallthru
          _
        // Predicated region
        $region57: #{actor_forward.1} parent=47 // pred_check
          %p316 = pneg %p86
        $region58: #{actor_forward.1} parent=47 // pred_check_branch
          %318 = sbr.rel (%p316) target = $region60
        $region59: #{actor_forward.1} parent=47 // pred_region
          %320 = dma.done [#allocation5], 2048
        $region60: #{actor_forward.1} parent=47 // pred_fallthru
          _
        // Predicated region
        $region61: #{actor_forward.1} parent=47 // pred_check
          %p321 = pneg %p107
        $region62: #{actor_forward.1} parent=47 // pred_check_branch
          %323 = sbr.rel (%p321) target = $region64
        $region63: #{actor_forward.1} parent=47 // pred_region
          %325 = dma.done [#allocation8], 2048
        $region64: #{actor_forward.1} parent=47 // pred_fallthru
          _
        // Predicated region
        $region65: #{actor_forward.1} parent=47 // pred_check
          %p326 = pneg %p128
        $region66: #{actor_forward.1} parent=47 // pred_check_branch
          %328 = sbr.rel (%p326) target = $region68
        $region67: #{actor_forward.1} parent=47 // pred_region
          %330 = dma.done [#allocation8], 16
        $region68: #{actor_forward.1} parent=47 // pred_fallthru
          _
        %s331 = sand.u32 %s31, 1
        %s332 = scalar_lea.sflag [#allocation3], %s331
        %s333 = sand.u32 %s31, 1
        %s334 = smul.addr %s333, 8
        %s335 = scalar_lea.vmem [#allocation2], %s334
        %p336 = pneg %p44
        %p337 = pneg %p41
        %p338 = pneg %p65
        %p339 = pneg %p62
        %p340 = pneg %p86
        %p341 = pneg %p83
        %p342 = pneg %p107
        %p343 = pneg %p104
        %p344 = pneg %p128
        %p345 = pneg %p125
        %p346 = pneg %p149
        %p347 = pneg %p146
        %p348 = pneg %p170
        %p349 = pneg %p167
        %p350 = pneg %p196
        %p351 = pneg %p193
        %p352 = scmp.lt.s32.totalorder %s23, 1
        %s353 = scalar_select %p352, %s23, 1
        %s354 = smul.addr %s353, 8
        %s355 = scalar_lea.vmem %s7, %s354
        %p356 = scmp.lt.s32.totalorder %s23, 1
        %s357 = scalar_select %p356, %s23, 1
        %s358 = smul.addr %s357, 8
        %s359 = scalar_lea.vmem %s7, %s358
        %v360 = vld [vmem:[%s305] sm:$0xff]
        %v361 = vld [vmem:[#allocation4] sm:$0xff]
        %v362 = vld [vmem:[#allocation4 + $0x8] sm:$0xff]
        %v363 = vld [vmem:[#allocation4 + $0x10] sm:$0xff]
        %v364 = vld [vmem:[#allocation4 + $0x18] sm:$0xff]
        %v365 = vld [vmem:[#allocation9] sm:$0x1]
        %v367 = vperm.slane %v365, 0
        %vm369 = vcmask 261120
        %v371 = vsel %vm369, %v360, 0
        %373 = vmatpush.msra.mxu0 0.0
        %374 = vmatpush.msra.mxu0 0.0
        %375 = vmatpush.msra.mxu0 0.0
        %376 = vmatpush.msra.mxu0 0.0
        %377 = vmatpush.msra.mxu0 0.0
        %378 = vmatpush.msra.mxu0 0.0
        %379 = vmatpush.msra.mxu0 0.0
        %380 = vmatpush.msra.mxu0 0.0
        %381 = vmatpush.msra.mxu0 0.0
        %382 = vmatpush.msra.mxu0 0.0
        %383 = vmatpush.msra.mxu0 0.0
        %384 = vmatpush.msra.mxu0 0.0
        %385 = vmatpush.msra.mxu0 %v364
        %386 = vmatpush.msra.mxu0 %v363
        %387 = vmatpush.msra.mxu0 %v362
        %388 = vmatpush.msra.mxu0 %v361
        %389 = vmatmul.f32.gmra.mxu0 %v371
        %v390 = vpop.f32.mrf.mxu0
        %v391 = vadd.f32 %v367, %v390
        %392 = vdwg.mxu0
        %v393 = vmax.f32 %v391, 0.0
        %v394 = vld [vmem:[#allocation6] sm:$0xff]
        %v395 = vld [vmem:[#allocation6 + $0x8] sm:$0xff]
        %v396 = vld [vmem:[#allocation6 + $0x10] sm:$0xff]
        %v397 = vld [vmem:[#allocation6 + $0x18] sm:$0xff]
        %v398 = vld [vmem:[#allocation6 + $0x20] sm:$0xff]
        %v399 = vld [vmem:[#allocation6 + $0x28] sm:$0xff]
        %v400 = vld [vmem:[#allocation6 + $0x30] sm:$0xff]
        %v401 = vld [vmem:[#allocation6 + $0x38] sm:$0xff]
        %v402 = vld [vmem:[#allocation6 + $0x40] sm:$0xff]
        %v403 = vld [vmem:[#allocation6 + $0x48] sm:$0xff]
        %v404 = vld [vmem:[#allocation6 + $0x50] sm:$0xff]
        %v405 = vld [vmem:[#allocation6 + $0x58] sm:$0xff]
        %v406 = vld [vmem:[#allocation6 + $0x60] sm:$0xff]
        %v407 = vld [vmem:[#allocation6 + $0x68] sm:$0xff]
        %v408 = vld [vmem:[#allocation6 + $0x70] sm:$0xff]
        %v409 = vld [vmem:[#allocation6 + $0x78] sm:$0xff]
        %v410 = vld [vmem:[%s5] sm:$0x1]
        %v412 = vperm.slane %v410, 0
        %414 = vmatpush.msra.mxu0 %v409
        %415 = vmatpush.msra.mxu0 %v408
        %416 = vmatpush.msra.mxu0 %v407
        %417 = vmatpush.msra.mxu0 %v406
        %418 = vmatpush.msra.mxu0 %v405
        %419 = vmatpush.msra.mxu0 %v404
        %420 = vmatpush.msra.mxu0 %v403
        %421 = vmatpush.msra.mxu0 %v402
        %422 = vmatpush.msra.mxu0 %v401
        %423 = vmatpush.msra.mxu0 %v400
        %424 = vmatpush.msra.mxu0 %v399
        %425 = vmatpush.msra.mxu0 %v398
        %426 = vmatpush.msra.mxu0 %v397
        %427 = vmatpush.msra.mxu0 %v396
        %428 = vmatpush.msra.mxu0 %v395
        %429 = vmatpush.msra.mxu0 %v394
        %430 = vmatmul.f32.gmra.mxu0 %v393
        %v431 = vpop.f32.mrf.mxu0
        %v432 = vadd.f32 %v412, %v431
        %433 = vdwg.mxu0
        %v434 = vmax.f32 %v432, 0.0
        %v435 = vld [vmem:[#allocation7] sm:$0xff]
        %v436 = vld [vmem:[#allocation7 + $0x8] sm:$0xff]
        %v437 = vld [vmem:[#allocation7 + $0x10] sm:$0xff]
        %v438 = vld [vmem:[#allocation7 + $0x18] sm:$0xff]
        %v439 = vld [vmem:[#allocation7 + $0x20] sm:$0xff]
        %v440 = vld [vmem:[#allocation7 + $0x28] sm:$0xff]
        %v441 = vld [vmem:[#allocation7 + $0x30] sm:$0xff]
        %v442 = vld [vmem:[#allocation7 + $0x38] sm:$0xff]
        %v443 = vld [vmem:[#allocation7 + $0x40] sm:$0xff]
        %v444 = vld [vmem:[#allocation7 + $0x48] sm:$0xff]
        %v445 = vld [vmem:[#allocation7 + $0x50] sm:$0xff]
        %v446 = vld [vmem:[#allocation7 + $0x58] sm:$0xff]
        %v447 = vld [vmem:[#allocation7 + $0x60] sm:$0xff]
        %v448 = vld [vmem:[#allocation7 + $0x68] sm:$0xff]
        %v449 = vld [vmem:[#allocation7 + $0x70] sm:$0xff]
        %v450 = vld [vmem:[#allocation7 + $0x78] sm:$0xff]
        %451 = vmatpush.msra.mxu0 %v450
        %452 = vmatpush.msra.mxu0 %v449
        %453 = vmatpush.msra.mxu0 %v448
        %454 = vmatpush.msra.mxu0 %v447
        %455 = vmatpush.msra.mxu0 %v446
        %456 = vmatpush.msra.mxu0 %v445
        %457 = vmatpush.msra.mxu0 %v444
        %458 = vmatpush.msra.mxu0 %v443
        %459 = vmatpush.msra.mxu0 %v442
        %460 = vmatpush.msra.mxu0 %v441
        %461 = vmatpush.msra.mxu0 %v440
        %462 = vmatpush.msra.mxu0 %v439
        %463 = vmatpush.msra.mxu0 %v438
        %464 = vmatpush.msra.mxu0 %v437
        %465 = vmatpush.msra.mxu0 %v436
        %466 = vmatpush.msra.mxu0 %v435
        %467 = vmatmul.f32.gmra.mxu0 %v434
        %v468 = vpop.f32.mrf.mxu0
        %v469 = vadd.f32 0.0, %v468
        %470 = vdwg.mxu0
        %v471 = vld [vmem:[%s6] sm:$0x1]
        %v473 = vperm.slane %v471, 0
        %v475 = vadd.f32 %v469, %v473
        %v476 = vtanh.pop %v475
        %vm477 = vcmask 64512
        %478 = vst.msk [vmem:[%s359] sm:$0xff] %vm477, %v476
        %p479 = scmp.lt.s32.totalorder %s23, 1
        %s480 = scalar_select %p479, %s23, 1
        %s481 = smul.addr %s480, 8
        %s482 = scalar_lea.vmem %s7, %s481
        // Predicated region
        $region69: #{actor_forward.1} parent=47 // pred_check
          %p483 = pneg %p193
        $region70: #{actor_forward.1} parent=47 // pred_check_branch
          %485 = sbr.rel (%p483) target = $region72
        $region71: #{actor_forward.1} parent=47 // pred_region
          _
        $region72: #{actor_forward.1} parent=47 // pred_fallthru
          _
      $region48: #{actor_forward.1} parent=5 // pred_fallthru
        _
      %p486 = scmp.le.s32.totalorder 2, %s18
      // Predicated region
      $region73: #{actor_forward.1} parent=5 // pred_check
        %p487 = pneg %p486
      $region74: #{actor_forward.1} parent=5 // pred_check_branch
        %489 = sbr.rel (%p487) target = $region76
      $region75: #{actor_forward.1} parent=5 // pred_region
        %s490 = ssub.s32 %s18, 2
        // Predicated region
        $region77: #{actor_forward.1} parent=75 // pred_check
          %p491 = pneg %p199
        $region78: #{actor_forward.1} parent=75 // pred_check_branch
          %493 = sbr.rel (%p491) target = $region80
        $region79: #{actor_forward.1} parent=75 // pred_region
          %p494 = scmp.lt.s32.totalorder %s24, 1
          %s495 = scalar_select %p494, %s24, 1
          %s496 = smul.addr %s495, 8
          %s497 = scalar_lea.vmem %s7, %s496
        $region80: #{actor_forward.1} parent=75 // pred_fallthru
          _
      $region76: #{actor_forward.1} parent=5 // pred_fallthru
        _
    $region6: #{actor_forward.1} parent=1 // loop_footer
      %s22 = sadd.s32 1, %s18
    $region7: #{actor_forward.1} parent=1 // loop_footer_branch
      %17 = sbr.rel target = $region3
    $region8: #{actor_forward.1} parent=1 // loop_exit
      _
    %498 = vsyncpa [#allocation3], 1
    %s499 = scalar_lea.sflag [#allocation3], 1
    %500 = vsyncpa %s499, 1
    %501 = vsyncpa [#allocation5], 1
    %502 = vsyncpa [#allocation8], 1

</llo_original>
